<compile_context>
chip_gen: v7x
topology: tpu7x:2x2x1
jax: 0.10.0
libtpu: 0.0.40
codegen_flags: <defaults>
</compile_context>

<pallas_src>
import functools

import jax
import jax.numpy as jnp
from jax.experimental import pallas as pl
from jax.experimental.pallas import tpu as pltpu

CODE_DIM = 128          # latent code width (already lane-aligned)
HIDDEN = 150            # logical hidden width of the PyTorch module
HPAD = 256              # hidden width padded to a full MXU tile (v6e/v7x)
LANE = 128              # TPU lane width


def _round_up(x, m):
    return ((x + m - 1) // m) * m


def _vae_fwd_kernel(
    obs_ref, eps_ref,
    w1_ref, b1_ref, w2_ref, b2_ref,
    wh_ref, bh_ref,
    wd1_ref, bd1_ref, wd2_ref, bd2_ref, wd3_ref, bd3_ref,
    out_ref,
    *, out_pad,
):
    f32 = jnp.float32
    bf16 = jnp.bfloat16

    x = obs_ref[...]                      # (TB, obs_pad) bf16, zero-padded cols

    # ---- encoder trunk: Linear -> ReLU -> Linear -> ReLU (MXU + VPU) ----
    h = jnp.dot(x, w1_ref[...], preferred_element_type=f32) + b1_ref[...]
    h = jnp.maximum(h, 0.0)
    h = jnp.dot(h.astype(bf16), w2_ref[...], preferred_element_type=f32) + b2_ref[...]
    h = jnp.maximum(h, 0.0)

    # ---- fused mu|logvar head: one (HPAD, 2*CODE_DIM) matmul ----
    head = jnp.dot(h.astype(bf16), wh_ref[...], preferred_element_type=f32) + bh_ref[...]
    mu = head[:, :CODE_DIM]
    logvar = head[:, CODE_DIM:]

    # ---- reparameterization (f32 on VPU/EUP) ----
    stds = jnp.exp(0.5 * logvar)
    code = eps_ref[...] * stds + mu       # eps kept f32 (tiny, elementwise only)

    # ---- decoder: Linear -> ReLU -> Linear -> ReLU -> Linear ----
    d = jnp.dot(code.astype(bf16), wd1_ref[...], preferred_element_type=f32) + bd1_ref[...]
    d = jnp.maximum(d, 0.0)
    d = jnp.dot(d.astype(bf16), wd2_ref[...], preferred_element_type=f32) + bd2_ref[...]
    d = jnp.maximum(d, 0.0)
    dec = jnp.dot(d.astype(bf16), wd3_ref[...], preferred_element_type=f32) + bd3_ref[...]

    # ---- single lane-dense output slab: [dec_padded | mu | logvar] ----
    out_ref[:, :out_pad] = dec
    out_ref[:, out_pad:out_pad + CODE_DIM] = mu
    out_ref[:, out_pad + CODE_DIM:] = logvar


def init_params(obs_dim, key):
    """Logical (unpadded, f32) parameters.

    Shapes match the PyTorch module with weights stored (in, out) so the
    forward is x @ W + b.  PyTorch uses orthogonal init + zero bias; here we
    use deterministic scaled-normal weights (synthetic kernel, not a
    checkpoint load) and zero biases.
    """
    ks = jax.random.split(key, 8)

    def lin(k, fan_in, fan_out):
        w = jax.random.normal(k, (fan_in, fan_out), jnp.float32) / jnp.sqrt(
            jnp.float32(fan_in)
        )
        b = jnp.zeros((1, fan_out), jnp.float32)
        return w, b

    w1, b1 = lin(ks[0], obs_dim, HIDDEN)
    w2, b2 = lin(ks[1], HIDDEN, HIDDEN)
    wmu, bmu = lin(ks[2], HIDDEN, CODE_DIM)
    wlv, blv = lin(ks[3], HIDDEN, CODE_DIM)
    wd1, bd1 = lin(ks[4], CODE_DIM, HIDDEN)
    wd2, bd2 = lin(ks[5], HIDDEN, HIDDEN)
    wd3, bd3 = lin(ks[6], HIDDEN, obs_dim)
    return (w1, b1, w2, b2, wmu, bmu, wlv, blv, wd1, bd1, wd2, bd2, wd3, bd3)


def pack_params(params, obs_dim):
    """Pad to lane-aligned shapes, fuse mu|logvar heads, cast weights to bf16.

    Zero padding (weights AND biases) keeps the forward math exact.
    """
    (w1, b1, w2, b2, wmu, bmu, wlv, blv, wd1, bd1, wd2, bd2, wd3, bd3) = params
    obs_pad = _round_up(obs_dim, LANE)

    def pad_w(w, rows, cols):
        out = jnp.zeros((rows, cols), jnp.bfloat16)
        return out.at[: w.shape[0], : w.shape[1]].set(w.astype(jnp.bfloat16))

    def pad_b(b, cols):
        out = jnp.zeros((1, cols), jnp.float32)
        return out.at[:, : b.shape[1]].set(b.astype(jnp.float32))

    wh = jnp.concatenate([wmu, wlv], axis=1)   # (HIDDEN, 2*CODE_DIM)
    bh = jnp.concatenate([bmu, blv], axis=1)   # (1, 2*CODE_DIM)

    return (
        pad_w(w1, obs_pad, HPAD), pad_b(b1, HPAD),
        pad_w(w2, HPAD, HPAD), pad_b(b2, HPAD),
        pad_w(wh, HPAD, 2 * CODE_DIM), pad_b(bh, 2 * CODE_DIM),
        pad_w(wd1, CODE_DIM, HPAD), pad_b(bd1, HPAD),
        pad_w(wd2, HPAD, HPAD), pad_b(bd2, HPAD),
        pad_w(wd3, HPAD, obs_pad), pad_b(bd3, obs_pad),
    )


@functools.partial(jax.jit, static_argnames=("obs_dim",))
def vae_forward(obs_z, epsilon, packed_params, *, obs_dim):
    B = obs_z.shape[0]
    obs_pad = _round_up(obs_dim, LANE)
    out_total = obs_pad + 2 * CODE_DIM

    # Batch tiling: pick a tile (<=256 rows), pad batch so the grid divides.
    tb = min(256, _round_up(B, 8))
    bp = _round_up(B, tb)
    grid = (bp // tb,)

    # Lane- and sublane-aligned, zero-padded inputs (obs in bf16, eps in f32).
    obs_p = jnp.zeros((bp, obs_pad), jnp.bfloat16)
    obs_p = obs_p.at[:B, :obs_dim].set(obs_z.astype(jnp.bfloat16))
    eps_p = jnp.zeros((bp, CODE_DIM), jnp.float32)
    eps_p = eps_p.at[:B, :].set(epsilon.astype(jnp.float32))

    const_map = lambda i: (0, 0)   # weights/biases stay resident in VMEM
    in_specs = [
        pl.BlockSpec((tb, obs_pad), lambda i: (i, 0)),
        pl.BlockSpec((tb, CODE_DIM), lambda i: (i, 0)),
    ] + [pl.BlockSpec(p.shape, const_map) for p in packed_params]

    out = pl.pallas_call(
        functools.partial(_vae_fwd_kernel, out_pad=obs_pad),
        out_shape=jax.ShapeDtypeStruct((bp, out_total), jnp.float32),
        grid=grid,
        in_specs=in_specs,
        out_specs=pl.BlockSpec((tb, out_total), lambda i: (i, 0)),
        compiler_params=pltpu.CompilerParams(
            dimension_semantics=("parallel",),
        ),
    )(obs_p, eps_p, *packed_params)

    obs_distr_params = out[:B, :obs_dim]
    mu = out[:B, obs_pad:obs_pad + CODE_DIM]
    logvar = out[:B, obs_pad + CODE_DIM:obs_pad + 2 * CODE_DIM]
    stds = jnp.exp(0.5 * logvar)   # recomputed here; saves a kernel writeback
    return obs_distr_params, (mu, logvar, stds)


def _reference_forward(obs_z, epsilon, params):
    """Plain-JAX reference with the same bf16-operand / f32-accumulate math."""
    bf16, f32 = jnp.bfloat16, jnp.float32
    (w1, b1, w2, b2, wmu, bmu, wlv, blv, wd1, bd1, wd2, bd2, wd3, bd3) = params

    def dot(a, w):
        return jnp.dot(a.astype(bf16), w.astype(bf16), preferred_element_type=f32)

    h = jnp.maximum(dot(obs_z, w1) + b1, 0.0)
    h = jnp.maximum(dot(h, w2) + b2, 0.0)
    mu = dot(h, wmu) + bmu
    logvar = dot(h, wlv) + blv
    stds = jnp.exp(0.5 * logvar)
    code = epsilon * stds + mu
    d = jnp.maximum(dot(code, wd1) + bd1, 0.0)
    d = jnp.maximum(dot(d, wd2) + bd2, 0.0)
    out = dot(d, wd3) + bd3
    return out, (mu, logvar, stds)


if __name__ == "__main__":
    obs_dim = 32
    batch = 8

    key = jax.random.PRNGKey(0)
    k_obs, k_eps, k_params = jax.random.split(key, 3)

    obs_z = jax.random.normal(k_obs, (batch, obs_dim), jnp.float32)
    epsilon = jax.random.normal(k_eps, (batch, CODE_DIM), jnp.float32)

    params = init_params(obs_dim, k_params)          # logical f32 params
    packed = pack_params(params, obs_dim)            # padded / fused / bf16

    obs_distr_params, (mu, logvar, stds) = vae_forward(
        obs_z, epsilon, packed, obs_dim=obs_dim
    )
    jax.block_until_ready((obs_distr_params, mu, logvar, stds))

    # Sanity-check against a plain-JAX reference at matching precision.
    ref_out, (ref_mu, ref_lv, ref_std) = _reference_forward(obs_z, epsilon, params)
    assert jnp.allclose(obs_distr_params, ref_out, atol=1e-2, rtol=1e-2)
    assert jnp.allclose(mu, ref_mu, atol=1e-2, rtol=1e-2)
    assert jnp.allclose(logvar, ref_lv, atol=1e-2, rtol=1e-2)
    assert jnp.allclose(stds, ref_std, atol=1e-2, rtol=1e-2)

    print("KERNEL_OK")
</pallas_src>

<mosaic_0001>
module attributes {stable_mosaic.version = 11 : i64} {
  func.func @_vae_fwd_kernel(%arg0: i32, %arg1: memref<8x128xbf16, #tpu.memory_space<vmem>>, %arg2: memref<8x128xf32, #tpu.memory_space<vmem>>, %arg3: memref<128x256xbf16, #tpu.memory_space<vmem>>, %arg4: memref<1x256xf32, #tpu.memory_space<vmem>>, %arg5: memref<256x256xbf16, #tpu.memory_space<vmem>>, %arg6: memref<1x256xf32, #tpu.memory_space<vmem>>, %arg7: memref<256x256xbf16, #tpu.memory_space<vmem>>, %arg8: memref<1x256xf32, #tpu.memory_space<vmem>>, %arg9: memref<128x256xbf16, #tpu.memory_space<vmem>>, %arg10: memref<1x256xf32, #tpu.memory_space<vmem>>, %arg11: memref<256x256xbf16, #tpu.memory_space<vmem>>, %arg12: memref<1x256xf32, #tpu.memory_space<vmem>>, %arg13: memref<256x128xbf16, #tpu.memory_space<vmem>>, %arg14: memref<1x128xf32, #tpu.memory_space<vmem>>, %arg15: memref<8x384xf32, #tpu.memory_space<vmem>>) attributes {dimension_semantics = [#tpu.dimension_semantics<parallel>], iteration_bounds = array<i64: 1>, scalar_prefetch = 0 : i64, scratch_operands = 0 : i64, tpu.core_type = #tpu.core_type<tc>, window_params = [{transform_indices = @transform_0, window_bounds = array<i64: 8, 128>}, {transform_indices = @transform_1, window_bounds = array<i64: 8, 128>}, {pipeline_mode = #tpu.pipeline_mode<synchronous>, transform_indices = @transform_2, window_bounds = array<i64: 128, 256>}, {pipeline_mode = #tpu.pipeline_mode<synchronous>, transform_indices = @transform_3, window_bounds = array<i64: 1, 256>}, {pipeline_mode = #tpu.pipeline_mode<synchronous>, transform_indices = @transform_4, window_bounds = array<i64: 256, 256>}, {pipeline_mode = #tpu.pipeline_mode<synchronous>, transform_indices = @transform_5, window_bounds = array<i64: 1, 256>}, {pipeline_mode = #tpu.pipeline_mode<synchronous>, transform_indices = @transform_6, window_bounds = array<i64: 256, 256>}, {pipeline_mode = #tpu.pipeline_mode<synchronous>, transform_indices = @transform_7, window_bounds = array<i64: 1, 256>}, {pipeline_mode = #tpu.pipeline_mode<synchronous>, transform_indices = @transform_8, window_bounds = array<i64: 128, 256>}, {pipeline_mode = #tpu.pipeline_mode<synchronous>, transform_indices = @transform_9, window_bounds = array<i64: 1, 256>}, {pipeline_mode = #tpu.pipeline_mode<synchronous>, transform_indices = @transform_10, window_bounds = array<i64: 256, 256>}, {pipeline_mode = #tpu.pipeline_mode<synchronous>, transform_indices = @transform_11, window_bounds = array<i64: 1, 256>}, {pipeline_mode = #tpu.pipeline_mode<synchronous>, transform_indices = @transform_12, window_bounds = array<i64: 256, 128>}, {pipeline_mode = #tpu.pipeline_mode<synchronous>, transform_indices = @transform_13, window_bounds = array<i64: 1, 128>}, {transform_indices = @transform_14, window_bounds = array<i64: 8, 384>}]} {
    %c0 = arith.constant 0 : index
    %c0_0 = arith.constant 0 : index
    %0 = vector.load %arg1[%c0, %c0_0] : memref<8x128xbf16, #tpu.memory_space<vmem>>, vector<8x128xbf16>
    %c0_1 = arith.constant 0 : index
    %c0_2 = arith.constant 0 : index
    %1 = vector.load %arg3[%c0_1, %c0_2] : memref<128x256xbf16, #tpu.memory_space<vmem>>, vector<128x256xbf16>
    %cst = arith.constant dense<0.000000e+00> : vector<8x256xf32>
    %2 = tpu.matmul %0, %1, %cst {dimension_numbers = #tpu.dot_dimension_numbers<[1], [0], [0], [1], [0, 0, 1, 1], [], []>} : vector<8x128xbf16>, vector<128x256xbf16>, vector<8x256xf32> -> vector<8x256xf32>
    %c0_3 = arith.constant 0 : index
    %c0_4 = arith.constant 0 : index
    %3 = vector.load %arg4[%c0_3, %c0_4] : memref<1x256xf32, #tpu.memory_space<vmem>>, vector<1x256xf32>
    %4 = vector.broadcast %3 : vector<1x256xf32> to vector<8x256xf32>
    %5 = arith.addf %2, %4 : vector<8x256xf32>
    %cst_5 = arith.constant 0.000000e+00 : f32
    %6 = vector.broadcast %cst_5 : f32 to vector<8x256xf32>
    %7 = arith.maximumf %5, %6 : vector<8x256xf32>
    %8 = arith.truncf %7 : vector<8x256xf32> to vector<8x256xbf16>
    %c0_6 = arith.constant 0 : index
    %c0_7 = arith.constant 0 : index
    %9 = vector.load %arg5[%c0_6, %c0_7] : memref<256x256xbf16, #tpu.memory_space<vmem>>, vector<256x256xbf16>
    %cst_8 = arith.constant dense<0.000000e+00> : vector<8x256xf32>
    %10 = tpu.matmul %8, %9, %cst_8 {dimension_numbers = #tpu.dot_dimension_numbers<[1], [0], [0], [1], [0, 0, 1, 1], [], []>} : vector<8x256xbf16>, vector<256x256xbf16>, vector<8x256xf32> -> vector<8x256xf32>
    %c0_9 = arith.constant 0 : index
    %c0_10 = arith.constant 0 : index
    %11 = vector.load %arg6[%c0_9, %c0_10] : memref<1x256xf32, #tpu.memory_space<vmem>>, vector<1x256xf32>
    %12 = vector.broadcast %11 : vector<1x256xf32> to vector<8x256xf32>
    %13 = arith.addf %10, %12 : vector<8x256xf32>
    %cst_11 = arith.constant 0.000000e+00 : f32
    %14 = vector.broadcast %cst_11 : f32 to vector<8x256xf32>
    %15 = arith.maximumf %13, %14 : vector<8x256xf32>
    %16 = arith.truncf %15 : vector<8x256xf32> to vector<8x256xbf16>
    %c0_12 = arith.constant 0 : index
    %c0_13 = arith.constant 0 : index
    %17 = vector.load %arg7[%c0_12, %c0_13] : memref<256x256xbf16, #tpu.memory_space<vmem>>, vector<256x256xbf16>
    %cst_14 = arith.constant dense<0.000000e+00> : vector<8x256xf32>
    %18 = tpu.matmul %16, %17, %cst_14 {dimension_numbers = #tpu.dot_dimension_numbers<[1], [0], [0], [1], [0, 0, 1, 1], [], []>} : vector<8x256xbf16>, vector<256x256xbf16>, vector<8x256xf32> -> vector<8x256xf32>
    %c0_15 = arith.constant 0 : index
    %c0_16 = arith.constant 0 : index
    %19 = vector.load %arg8[%c0_15, %c0_16] : memref<1x256xf32, #tpu.memory_space<vmem>>, vector<1x256xf32>
    %20 = vector.broadcast %19 : vector<1x256xf32> to vector<8x256xf32>
    %21 = arith.addf %18, %20 : vector<8x256xf32>
    %22 = vector.extract_strided_slice %21 {offsets = [0, 0], sizes = [8, 128], strides = [1, 1]} : vector<8x256xf32> to vector<8x128xf32>
    %23 = vector.extract_strided_slice %21 {offsets = [0, 128], sizes = [8, 128], strides = [1, 1]} : vector<8x256xf32> to vector<8x128xf32>
    %cst_17 = arith.constant 5.000000e-01 : f32
    %24 = vector.broadcast %cst_17 : f32 to vector<8x128xf32>
    %25 = arith.mulf %24, %23 : vector<8x128xf32>
    %26 = math.exp %25 : vector<8x128xf32>
    %c0_18 = arith.constant 0 : index
    %c0_19 = arith.constant 0 : index
    %27 = vector.load %arg2[%c0_18, %c0_19] : memref<8x128xf32, #tpu.memory_space<vmem>>, vector<8x128xf32>
    %28 = arith.mulf %27, %26 : vector<8x128xf32>
    %29 = arith.addf %28, %22 : vector<8x128xf32>
    %30 = arith.truncf %29 : vector<8x128xf32> to vector<8x128xbf16>
    %c0_20 = arith.constant 0 : index
    %c0_21 = arith.constant 0 : index
    %31 = vector.load %arg9[%c0_20, %c0_21] : memref<128x256xbf16, #tpu.memory_space<vmem>>, vector<128x256xbf16>
    %cst_22 = arith.constant dense<0.000000e+00> : vector<8x256xf32>
    %32 = tpu.matmul %30, %31, %cst_22 {dimension_numbers = #tpu.dot_dimension_numbers<[1], [0], [0], [1], [0, 0, 1, 1], [], []>} : vector<8x128xbf16>, vector<128x256xbf16>, vector<8x256xf32> -> vector<8x256xf32>
    %c0_23 = arith.constant 0 : index
    %c0_24 = arith.constant 0 : index
    %33 = vector.load %arg10[%c0_23, %c0_24] : memref<1x256xf32, #tpu.memory_space<vmem>>, vector<1x256xf32>
    %34 = vector.broadcast %33 : vector<1x256xf32> to vector<8x256xf32>
    %35 = arith.addf %32, %34 : vector<8x256xf32>
    %cst_25 = arith.constant 0.000000e+00 : f32
    %36 = vector.broadcast %cst_25 : f32 to vector<8x256xf32>
    %37 = arith.maximumf %35, %36 : vector<8x256xf32>
    %38 = arith.truncf %37 : vector<8x256xf32> to vector<8x256xbf16>
    %c0_26 = arith.constant 0 : index
    %c0_27 = arith.constant 0 : index
    %39 = vector.load %arg11[%c0_26, %c0_27] : memref<256x256xbf16, #tpu.memory_space<vmem>>, vector<256x256xbf16>
    %cst_28 = arith.constant dense<0.000000e+00> : vector<8x256xf32>
    %40 = tpu.matmul %38, %39, %cst_28 {dimension_numbers = #tpu.dot_dimension_numbers<[1], [0], [0], [1], [0, 0, 1, 1], [], []>} : vector<8x256xbf16>, vector<256x256xbf16>, vector<8x256xf32> -> vector<8x256xf32>
    %c0_29 = arith.constant 0 : index
    %c0_30 = arith.constant 0 : index
    %41 = vector.load %arg12[%c0_29, %c0_30] : memref<1x256xf32, #tpu.memory_space<vmem>>, vector<1x256xf32>
    %42 = vector.broadcast %41 : vector<1x256xf32> to vector<8x256xf32>
    %43 = arith.addf %40, %42 : vector<8x256xf32>
    %cst_31 = arith.constant 0.000000e+00 : f32
    %44 = vector.broadcast %cst_31 : f32 to vector<8x256xf32>
    %45 = arith.maximumf %43, %44 : vector<8x256xf32>
    %46 = arith.truncf %45 : vector<8x256xf32> to vector<8x256xbf16>
    %c0_32 = arith.constant 0 : index
    %c0_33 = arith.constant 0 : index
    %47 = vector.load %arg13[%c0_32, %c0_33] : memref<256x128xbf16, #tpu.memory_space<vmem>>, vector<256x128xbf16>
    %cst_34 = arith.constant dense<0.000000e+00> : vector<8x128xf32>
    %48 = tpu.matmul %46, %47, %cst_34 {dimension_numbers = #tpu.dot_dimension_numbers<[1], [0], [0], [1], [0, 0, 1, 1], [], []>} : vector<8x256xbf16>, vector<256x128xbf16>, vector<8x128xf32> -> vector<8x128xf32>
    %c0_35 = arith.constant 0 : index
    %c0_36 = arith.constant 0 : index
    %49 = vector.load %arg14[%c0_35, %c0_36] : memref<1x128xf32, #tpu.memory_space<vmem>>, vector<1x128xf32>
    %50 = vector.broadcast %49 : vector<1x128xf32> to vector<8x128xf32>
    %51 = arith.addf %48, %50 : vector<8x128xf32>
    %c0_37 = arith.constant 0 : index
    %c0_38 = arith.constant 0 : index
    %52 = vector.load %arg15[%c0_37, %c0_38] : memref<8x384xf32, #tpu.memory_space<vmem>>, vector<8x128xf32>
    tpu.vector_store %arg15[%c0_37, %c0_38], %51 {strides = array<i32>} : memref<8x384xf32, #tpu.memory_space<vmem>>, vector<8x128xf32>,
    %c0_39 = arith.constant 0 : index
    %c128 = arith.constant 128 : index
    %53 = vector.load %arg15[%c0_39, %c128] : memref<8x384xf32, #tpu.memory_space<vmem>>, vector<8x128xf32>
    tpu.vector_store %arg15[%c0_39, %c128], %22 {strides = array<i32>} : memref<8x384xf32, #tpu.memory_space<vmem>>, vector<8x128xf32>,
    %c0_40 = arith.constant 0 : index
    %c256 = arith.constant 256 : index
    %54 = vector.load %arg15[%c0_40, %c256] : memref<8x384xf32, #tpu.memory_space<vmem>>, vector<8x128xf32>
    tpu.vector_store %arg15[%c0_40, %c256], %23 {strides = array<i32>} : memref<8x384xf32, #tpu.memory_space<vmem>>, vector<8x128xf32>,
    return
  }
  func.func @transform_0(%arg0: i32) -> (i32, i32) {
    %c0_i32 = arith.constant 0 : i32
    %c0_i32_0 = arith.constant 0 : i32
    return %arg0, %c0_i32 : i32, i32
  }
  func.func @transform_1(%arg0: i32) -> (i32, i32) {
    %c0_i32 = arith.constant 0 : i32
    %c0_i32_0 = arith.constant 0 : i32
    return %arg0, %c0_i32 : i32, i32
  }
  func.func @transform_2(%arg0: i32) -> (i32, i32) {
    %c0_i32 = arith.constant 0 : i32
    %c0_i32_0 = arith.constant 0 : i32
    %c0_i32_1 = arith.constant 0 : i32
    return %c0_i32, %c0_i32_0 : i32, i32
  }
  func.func @transform_3(%arg0: i32) -> (i32, i32) {
    %c0_i32 = arith.constant 0 : i32
    %c0_i32_0 = arith.constant 0 : i32
    %c0_i32_1 = arith.constant 0 : i32
    return %c0_i32, %c0_i32_0 : i32, i32
  }
  func.func @transform_4(%arg0: i32) -> (i32, i32) {
    %c0_i32 = arith.constant 0 : i32
    %c0_i32_0 = arith.constant 0 : i32
    %c0_i32_1 = arith.constant 0 : i32
    return %c0_i32, %c0_i32_0 : i32, i32
  }
  func.func @transform_5(%arg0: i32) -> (i32, i32) {
    %c0_i32 = arith.constant 0 : i32
    %c0_i32_0 = arith.constant 0 : i32
    %c0_i32_1 = arith.constant 0 : i32
    return %c0_i32, %c0_i32_0 : i32, i32
  }
  func.func @transform_6(%arg0: i32) -> (i32, i32) {
    %c0_i32 = arith.constant 0 : i32
    %c0_i32_0 = arith.constant 0 : i32
    %c0_i32_1 = arith.constant 0 : i32
    return %c0_i32, %c0_i32_0 : i32, i32
  }
  func.func @transform_7(%arg0: i32) -> (i32, i32) {
    %c0_i32 = arith.constant 0 : i32
    %c0_i32_0 = arith.constant 0 : i32
    %c0_i32_1 = arith.constant 0 : i32
    return %c0_i32, %c0_i32_0 : i32, i32
  }
  func.func @transform_8(%arg0: i32) -> (i32, i32) {
    %c0_i32 = arith.constant 0 : i32
    %c0_i32_0 = arith.constant 0 : i32
    %c0_i32_1 = arith.constant 0 : i32
    return %c0_i32, %c0_i32_0 : i32, i32
  }
  func.func @transform_9(%arg0: i32) -> (i32, i32) {
    %c0_i32 = arith.constant 0 : i32
    %c0_i32_0 = arith.constant 0 : i32
    %c0_i32_1 = arith.constant 0 : i32
    return %c0_i32, %c0_i32_0 : i32, i32
  }
  func.func @transform_10(%arg0: i32) -> (i32, i32) {
    %c0_i32 = arith.constant 0 : i32
    %c0_i32_0 = arith.constant 0 : i32
    %c0_i32_1 = arith.constant 0 : i32
    return %c0_i32, %c0_i32_0 : i32, i32
  }
  func.func @transform_11(%arg0: i32) -> (i32, i32) {
    %c0_i32 = arith.constant 0 : i32
    %c0_i32_0 = arith.constant 0 : i32
    %c0_i32_1 = arith.constant 0 : i32
    return %c0_i32, %c0_i32_0 : i32, i32
  }
  func.func @transform_12(%arg0: i32) -> (i32, i32) {
    %c0_i32 = arith.constant 0 : i32
    %c0_i32_0 = arith.constant 0 : i32
    %c0_i32_1 = arith.constant 0 : i32
    return %c0_i32, %c0_i32_0 : i32, i32
  }
  func.func @transform_13(%arg0: i32) -> (i32, i32) {
    %c0_i32 = arith.constant 0 : i32
    %c0_i32_0 = arith.constant 0 : i32
    %c0_i32_1 = arith.constant 0 : i32
    return %c0_i32, %c0_i32_0 : i32, i32
  }
  func.func @transform_14(%arg0: i32) -> (i32, i32) {
    %c0_i32 = arith.constant 0 : i32
    %c0_i32_0 = arith.constant 0 : i32
    return %arg0, %c0_i32 : i32, i32
  }
}

</mosaic_0001>

<llo_original>
// kernel: vae_forward.1
$region0: #{vae_forward.1}
  #allocation0 [shape = 'u32[]', space=smem, size = 0x4, offset = 0x4, fixed_abs, tag = 'smem constant byte address 0x4 - core index']
  #allocation1 [shape = 'u32[144,128]{1,0:T(1,128)}', space=vmem, size = 0x12000, scoped, tag = 'internal scratch']
  %s0 = inlined_call_operand.vmem [shape: bf16[8,128], index: 0, kind: input, shape index: {}]
  %s1 = inlined_call_operand.vmem [shape: f32[8,128], index: 1, kind: input, shape index: {}]
  %s2 = inlined_call_operand.hbm [shape: bf16[128,256], index: 2, kind: input, shape index: {}]
  %s3 = inlined_call_operand.vmem [shape: f32[1,256], index: 3, kind: input, shape index: {}]
  %s4 = inlined_call_operand.hbm [shape: bf16[256,256], index: 4, kind: input, shape index: {}]
  %s5 = inlined_call_operand.vmem [shape: f32[1,256], index: 5, kind: input, shape index: {}]
  %s6 = inlined_call_operand.hbm [shape: bf16[256,256], index: 6, kind: input, shape index: {}]
  %s7 = inlined_call_operand.vmem [shape: f32[1,256], index: 7, kind: input, shape index: {}]
  %s8 = inlined_call_operand.hbm [shape: bf16[128,256], index: 8, kind: input, shape index: {}]
  %s9 = inlined_call_operand.vmem [shape: f32[1,256], index: 9, kind: input, shape index: {}]
  %s10 = inlined_call_operand.hbm [shape: bf16[256,256], index: 10, kind: input, shape index: {}]
  %s11 = inlined_call_operand.vmem [shape: f32[1,256], index: 11, kind: input, shape index: {}]
  %s12 = inlined_call_operand.hbm [shape: bf16[256,128], index: 12, kind: input, shape index: {}]
  %s13 = inlined_call_operand.vmem [shape: f32[1,128], index: 13, kind: input, shape index: {}]
  %s14 = inlined_call_operand.vmem [shape: f32[8,384], index: 14, kind: output, shape index: {}]
  %s15 = sld [smem:[#allocation0]]
  $region90: #{vae_forward.1} parent=0
    _
  %s17 = ssub.s32 1, %s15
  %s18 = scalar_select 0, %s17, %s15
  $region1: #{vae_forward.1} parent=0
    #allocation2 [shape = 'u8[65536]{0}', space=vmem, size = 0x10000, scoped, tag = 'input window, operand 2, single buffered']
    #allocation3 [shape = 's32[1]{0}', space=sflag, size = 0x4, scoped, tag = 'scoped memory for vae_forward.1']
    #allocation4 [shape = 'u8[131072]{0}', space=vmem, size = 0x20000, scoped, tag = 'input window, operand 4, single buffered']
    #allocation5 [shape = 's32[1]{0}', space=sflag, size = 0x4, scoped, tag = 'scoped memory for vae_forward.1']
    #allocation6 [shape = 'u8[131072]{0}', space=vmem, size = 0x20000, scoped, tag = 'input window, operand 6, single buffered']
    #allocation7 [shape = 'u8[65536]{0}', space=vmem, size = 0x10000, scoped, tag = 'input window, operand 8, single buffered']
    #allocation8 [shape = 's32[1]{0}', space=sflag, size = 0x4, scoped, tag = 'scoped memory for vae_forward.1']
    #allocation9 [shape = 'u8[131072]{0}', space=vmem, size = 0x20000, scoped, tag = 'input window, operand 10, single buffered']
    #allocation10 [shape = 'u8[65536]{0}', space=vmem, size = 0x10000, scoped, tag = 'input window, operand 12, single buffered']
    #allocation11 [shape = 's32[1]{0}', space=sflag, size = 0x4, scoped, tag = 'scoped memory for vae_forward.1']
    %19 = vsyncpa [#allocation3], 0
    %20 = vsyncpa [#allocation5], 0
    %21 = vsyncpa [#allocation8], 0
    %22 = vsyncpa [#allocation11], 0
    // Predicated region
    $region2: #{vae_forward.1} parent=1 // pred_check
      _
    $region3: #{vae_forward.1} parent=1 // pred_check_branch
      %24 = sbr.rel (0) target = $region5
    $region4: #{vae_forward.1} parent=1 // pred_region
      _
    $region5: #{vae_forward.1} parent=1 // pred_fallthru
      _
    // Predicated region
    $region6: #{vae_forward.1} parent=1 // pred_check
      _
    $region7: #{vae_forward.1} parent=1 // pred_check_branch
      %26 = sbr.rel (0) target = $region9
    $region8: #{vae_forward.1} parent=1 // pred_region
      _
    $region9: #{vae_forward.1} parent=1 // pred_fallthru
      _
    // Predicated region
    $region10: #{vae_forward.1} parent=1 // pred_check
      _
    $region11: #{vae_forward.1} parent=1 // pred_check_branch
      %28 = sbr.rel (0) target = $region13
    $region12: #{vae_forward.1} parent=1 // pred_region
      %s30 = ssub.s32 2048, 2048
      %31 = vsyncadd [#allocation3], %s30
      %s32 = sshll.u32 [#allocation2], 4
      %s33 = int_to_ptr.vmem [resolvable:$true] %s32
      %38 = dma.hbm_to_vmem [thread:$0]  %s2, 2048, %s33, [#allocation3], 128, 128, 8
    $region13: #{vae_forward.1} parent=1 // pred_fallthru
      _
    // Predicated region
    $region14: #{vae_forward.1} parent=1 // pred_check
      _
    $region15: #{vae_forward.1} parent=1 // pred_check_branch
      %40 = sbr.rel (0) target = $region17
    $region16: #{vae_forward.1} parent=1 // pred_region
      _
    $region17: #{vae_forward.1} parent=1 // pred_fallthru
      _
    // Predicated region
    $region18: #{vae_forward.1} parent=1 // pred_check
      _
    $region19: #{vae_forward.1} parent=1 // pred_check_branch
      %42 = sbr.rel (0) target = $region21
    $region20: #{vae_forward.1} parent=1 // pred_region
      %s44 = ssub.s32 4096, 4096
      %45 = vsyncadd [#allocation5], %s44
      %s46 = sshll.u32 [#allocation4], 4
      %s47 = int_to_ptr.vmem [resolvable:$true] %s46
      %52 = dma.hbm_to_vmem [thread:$0]  %s4, 4096, %s47, [#allocation5], 128, 128, 8
    $region21: #{vae_forward.1} parent=1 // pred_fallthru
      _
    // Predicated region
    $region22: #{vae_forward.1} parent=1 // pred_check
      _
    $region23: #{vae_forward.1} parent=1 // pred_check_branch
      %54 = sbr.rel (0) target = $region25
    $region24: #{vae_forward.1} parent=1 // pred_region
      _
    $region25: #{vae_forward.1} parent=1 // pred_fallthru
      _
    // Predicated region
    $region26: #{vae_forward.1} parent=1 // pred_check
      _
    $region27: #{vae_forward.1} parent=1 // pred_check_branch
      %56 = sbr.rel (0) target = $region29
    $region28: #{vae_forward.1} parent=1 // pred_region
      %s58 = ssub.s32 4096, 4096
      %59 = vsyncadd [#allocation5], %s58
      %s60 = sshll.u32 [#allocation6], 4
      %s61 = int_to_ptr.vmem [resolvable:$true] %s60
      %66 = dma.hbm_to_vmem [thread:$0]  %s6, 4096, %s61, [#allocation5], 128, 128, 8
    $region29: #{vae_forward.1} parent=1 // pred_fallthru
      _
    // Predicated region
    $region30: #{vae_forward.1} parent=1 // pred_check
      _
    $region31: #{vae_forward.1} parent=1 // pred_check_branch
      %68 = sbr.rel (0) target = $region33
    $region32: #{vae_forward.1} parent=1 // pred_region
      _
    $region33: #{vae_forward.1} parent=1 // pred_fallthru
      _
    // Predicated region
    $region34: #{vae_forward.1} parent=1 // pred_check
      _
    $region35: #{vae_forward.1} parent=1 // pred_check_branch
      %70 = sbr.rel (0) target = $region37
    $region36: #{vae_forward.1} parent=1 // pred_region
      %s72 = ssub.s32 2048, 2048
      %73 = vsyncadd [#allocation8], %s72
      %s74 = sshll.u32 [#allocation7], 4
      %s75 = int_to_ptr.vmem [resolvable:$true] %s74
      %80 = dma.hbm_to_vmem [thread:$0]  %s8, 2048, %s75, [#allocation8], 128, 128, 8
    $region37: #{vae_forward.1} parent=1 // pred_fallthru
      _
    // Predicated region
    $region38: #{vae_forward.1} parent=1 // pred_check
      _
    $region39: #{vae_forward.1} parent=1 // pred_check_branch
      %82 = sbr.rel (0) target = $region41
    $region40: #{vae_forward.1} parent=1 // pred_region
      _
    $region41: #{vae_forward.1} parent=1 // pred_fallthru
      _
    // Predicated region
    $region42: #{vae_forward.1} parent=1 // pred_check
      _
    $region43: #{vae_forward.1} parent=1 // pred_check_branch
      %84 = sbr.rel (0) target = $region45
    $region44: #{vae_forward.1} parent=1 // pred_region
      %s86 = ssub.s32 4096, 4096
      %87 = vsyncadd [#allocation8], %s86
      %s88 = sshll.u32 [#allocation9], 4
      %s89 = int_to_ptr.vmem [resolvable:$true] %s88
      %94 = dma.hbm_to_vmem [thread:$0]  %s10, 4096, %s89, [#allocation8], 128, 128, 8
    $region45: #{vae_forward.1} parent=1 // pred_fallthru
      _
    // Predicated region
    $region46: #{vae_forward.1} parent=1 // pred_check
      _
    $region47: #{vae_forward.1} parent=1 // pred_check_branch
      %96 = sbr.rel (0) target = $region49
    $region48: #{vae_forward.1} parent=1 // pred_region
      _
    $region49: #{vae_forward.1} parent=1 // pred_fallthru
      _
    // Predicated region
    $region50: #{vae_forward.1} parent=1 // pred_check
      _
    $region51: #{vae_forward.1} parent=1 // pred_check_branch
      %98 = sbr.rel (0) target = $region53
    $region52: #{vae_forward.1} parent=1 // pred_region
      %s100 = ssub.s32 2048, 2048
      %101 = vsyncadd [#allocation11], %s100
      %s102 = sshll.u32 [#allocation10], 4
      %s103 = int_to_ptr.vmem [resolvable:$true] %s102
      %108 = dma.hbm_to_vmem [thread:$0]  %s12, 2048, %s103, [#allocation11], 64, 64, 4
    $region53: #{vae_forward.1} parent=1 // pred_fallthru
      _
    // Predicated region
    $region54: #{vae_forward.1} parent=1 // pred_check
      _
    $region55: #{vae_forward.1} parent=1 // pred_check_branch
      %110 = sbr.rel (0) target = $region57
    $region56: #{vae_forward.1} parent=1 // pred_region
      _
    $region57: #{vae_forward.1} parent=1 // pred_fallthru
      _
    // Predicated region
    $region58: #{vae_forward.1} parent=1 // pred_check
      _
    $region59: #{vae_forward.1} parent=1 // pred_check_branch
      %112 = sbr.rel (0) target = $region61
    $region60: #{vae_forward.1} parent=1 // pred_region
      %113 = dma.done [#allocation3], 2048
    $region61: #{vae_forward.1} parent=1 // pred_fallthru
      _
    // Predicated region
    $region62: #{vae_forward.1} parent=1 // pred_check
      _
    $region63: #{vae_forward.1} parent=1 // pred_check_branch
      %115 = sbr.rel (0) target = $region65
    $region64: #{vae_forward.1} parent=1 // pred_region
      %116 = dma.done [#allocation5], 4096
    $region65: #{vae_forward.1} parent=1 // pred_fallthru
      _
    // Predicated region
    $region66: #{vae_forward.1} parent=1 // pred_check
      _
    $region67: #{vae_forward.1} parent=1 // pred_check_branch
      %118 = sbr.rel (0) target = $region69
    $region68: #{vae_forward.1} parent=1 // pred_region
      %119 = dma.done [#allocation5], 4096
    $region69: #{vae_forward.1} parent=1 // pred_fallthru
      _
    // Predicated region
    $region70: #{vae_forward.1} parent=1 // pred_check
      _
    $region71: #{vae_forward.1} parent=1 // pred_check_branch
      %121 = sbr.rel (0) target = $region73
    $region72: #{vae_forward.1} parent=1 // pred_region
      %122 = dma.done [#allocation8], 2048
    $region73: #{vae_forward.1} parent=1 // pred_fallthru
      _
    // Predicated region
    $region74: #{vae_forward.1} parent=1 // pred_check
      _
    $region75: #{vae_forward.1} parent=1 // pred_check_branch
      %124 = sbr.rel (0) target = $region77
    $region76: #{vae_forward.1} parent=1 // pred_region
      %125 = dma.done [#allocation8], 4096
    $region77: #{vae_forward.1} parent=1 // pred_fallthru
      _
    // Predicated region
    $region78: #{vae_forward.1} parent=1 // pred_check
      _
    $region79: #{vae_forward.1} parent=1 // pred_check_branch
      %127 = sbr.rel (0) target = $region81
    $region80: #{vae_forward.1} parent=1 // pred_region
      %128 = dma.done [#allocation11], 2048
    $region81: #{vae_forward.1} parent=1 // pred_fallthru
      _
    %v130 = vld [vmem:[%s0] sm:$0xf]
    %v131 = vld [vmem:[#allocation2] sm:$0xff]
    %v132 = vld [vmem:[#allocation2 + $0x8] sm:$0xff]
    %v133 = vld [vmem:[#allocation2 + $0x10] sm:$0xff]
    %v134 = vld [vmem:[#allocation2 + $0x18] sm:$0xff]
    %v135 = vld [vmem:[#allocation2 + $0x20] sm:$0xff]
    %v136 = vld [vmem:[#allocation2 + $0x28] sm:$0xff]
    %v137 = vld [vmem:[#allocation2 + $0x30] sm:$0xff]
    %v138 = vld [vmem:[#allocation2 + $0x38] sm:$0xff]
    %v139 = vld [vmem:[#allocation2 + $0x40] sm:$0xff]
    %v140 = vld [vmem:[#allocation2 + $0x48] sm:$0xff]
    %v141 = vld [vmem:[#allocation2 + $0x50] sm:$0xff]
    %v142 = vld [vmem:[#allocation2 + $0x58] sm:$0xff]
    %v143 = vld [vmem:[#allocation2 + $0x60] sm:$0xff]
    %v144 = vld [vmem:[#allocation2 + $0x68] sm:$0xff]
    %v145 = vld [vmem:[#allocation2 + $0x70] sm:$0xff]
    %v146 = vld [vmem:[#allocation2 + $0x78] sm:$0xff]
    %v147 = vld [vmem:[%s3] sm:$0x3]
    %v149 = vlaneseq
    %v150 = vshrl.u32 %v149, 7
    %v151 = vsub.s32 0, %v150
    %v152 = vrot.slane %v147, %v151
    %v153 = vlaneseq
    %v154 = vshrl.u32 %v153, 7
    %v155 = vsub.s32 1, %v154
    %v156 = vrot.slane %v147, %v155
    %v175 = vunpack.c.l.b16 %v131
    %v176 = vunpack.c.h.b16 %v131
    %v177 = vunpack.c.l.b16 %v132
    %v178 = vunpack.c.h.b16 %v132
    %v179 = vunpack.c.l.b16 %v133
    %v180 = vunpack.c.h.b16 %v133
    %v181 = vunpack.c.l.b16 %v134
    %v182 = vunpack.c.h.b16 %v134
    %v183 = vunpack.c.l.b16 %v135
    %v184 = vunpack.c.h.b16 %v135
    %v185 = vunpack.c.l.b16 %v136
    %v186 = vunpack.c.h.b16 %v136
    %v187 = vunpack.c.l.b16 %v137
    %v188 = vunpack.c.h.b16 %v137
    %v189 = vunpack.c.l.b16 %v138
    %v190 = vunpack.c.h.b16 %v138
    %v191 = vunpack.c.l.b16 %v139
    %v192 = vunpack.c.h.b16 %v139
    %v193 = vunpack.c.l.b16 %v140
    %v194 = vunpack.c.h.b16 %v140
    %v195 = vunpack.c.l.b16 %v141
    %v196 = vunpack.c.h.b16 %v141
    %v197 = vunpack.c.l.b16 %v142
    %v198 = vunpack.c.h.b16 %v142
    %v199 = vunpack.c.l.b16 %v143
    %v200 = vunpack.c.h.b16 %v143
    %v201 = vunpack.c.l.b16 %v144
    %v202 = vunpack.c.h.b16 %v144
    %v203 = vunpack.c.l.b16 %v145
    %v204 = vunpack.c.h.b16 %v145
    %v205 = vunpack.c.l.b16 %v146
    %v206 = vunpack.c.h.b16 %v146
    %v207 = vpack.c.b16 %v177, %v175
    %v208 = vpack.c.b16 %v178, %v176
    %v209 = vpack.c.b16 %v181, %v179
    %v210 = vpack.c.b16 %v182, %v180
    %v211 = vpack.c.b16 %v185, %v183
    %v212 = vpack.c.b16 %v186, %v184
    %v213 = vpack.c.b16 %v189, %v187
    %v214 = vpack.c.b16 %v190, %v188
    %v215 = vpack.c.b16 %v193, %v191
    %v216 = vpack.c.b16 %v194, %v192
    %v217 = vpack.c.b16 %v197, %v195
    %v218 = vpack.c.b16 %v198, %v196
    %v219 = vpack.c.b16 %v201, %v199
    %v220 = vpack.c.b16 %v202, %v200
    %v221 = vpack.c.b16 %v205, %v203
    %v222 = vpack.c.b16 %v206, %v204
    %239 = vmatprep.subr.bf16.mxu0 %v208
    %240 = vmatpush1.bf16.msra.mxu0 %v207
    %241 = vmatprep.subr.bf16.mxu0 %v210
    %242 = vmatpush1.bf16.msra.mxu0 %v209
    %243 = vmatprep.subr.bf16.mxu0 %v212
    %244 = vmatpush1.bf16.msra.mxu0 %v211
    %245 = vmatprep.subr.bf16.mxu0 %v214
    %246 = vmatpush1.bf16.msra.mxu0 %v213
    %247 = vmatprep.subr.bf16.mxu0 %v216
    %248 = vmatpush1.bf16.msra.mxu0 %v215
    %249 = vmatprep.subr.bf16.mxu0 %v218
    %250 = vmatpush1.bf16.msra.mxu0 %v217
    %251 = vmatprep.subr.bf16.mxu0 %v220
    %252 = vmatpush1.bf16.msra.mxu0 %v219
    %253 = vmatprep.subr.bf16.mxu0 %v222
    %254 = vmatpush1.bf16.msra.mxu0 %v221
    %255 = vmatprep.subr.bf16.mxu0 0
    %256 = vmatpush1.bf16.msra.mxu0 0
    %257 = vmatprep.subr.bf16.mxu0 0
    %258 = vmatpush1.bf16.msra.mxu0 0
    %259 = vmatprep.subr.bf16.mxu0 0
    %260 = vmatpush1.bf16.msra.mxu0 0
    %261 = vmatprep.subr.bf16.mxu0 0
    %262 = vmatpush1.bf16.msra.mxu0 0
    %263 = vmatprep.subr.bf16.mxu0 0
    %264 = vmatpush1.bf16.msra.mxu0 0
    %265 = vmatprep.subr.bf16.mxu0 0
    %266 = vmatpush1.bf16.msra.mxu0 0
    %267 = vmatprep.subr.bf16.mxu0 0
    %268 = vmatpush1.bf16.msra.mxu0 0
    %269 = vmatprep.subr.bf16.mxu0 0
    %270 = vmatpush1.bf16.msra.mxu0 0
    %271 = vmatprep.mubr.bf16.mxu0 0
    %272 = vmatmul.mubr.bf16.gmra.mrb[0].mxu0 %v130
    %v273 = vpop.f32.mrb[0].mxu0
    %v274 = vadd.f32 %v152, %v273
    %v275 = vpop.f32.mrb[0].mxu0
    %v276 = vadd.f32 %v156, %v275
    %v277 = vpop.f32.mrb[0].mxu0
    %v278 = vpop.f32.mrb[0].mxu0
    %279 = vdwg.mxu0
    %v280 = vmax.f32 %v274, 0.0
    %v281 = vmax.f32 %v276, 0.0
    %v282 = vpack.c.bf16 %v280, %v280
    %v283 = vpack.c.bf16 %v281, %v281
    %v284 = vld [vmem:[#allocation4] sm:$0xff]
    %v285 = vld [vmem:[#allocation4 + $0x8] sm:$0xff]
    %v286 = vld [vmem:[#allocation4 + $0x10] sm:$0xff]
    %v287 = vld [vmem:[#allocation4 + $0x18] sm:$0xff]
    %v288 = vld [vmem:[#allocation4 + $0x20] sm:$0xff]
    %v289 = vld [vmem:[#allocation4 + $0x28] sm:$0xff]
    %v290 = vld [vmem:[#allocation4 + $0x30] sm:$0xff]
    %v291 = vld [vmem:[#allocation4 + $0x38] sm:$0xff]
    %v292 = vld [vmem:[#allocation4 + $0x40] sm:$0xff]
    %v293 = vld [vmem:[#allocation4 + $0x48] sm:$0xff]
    %v294 = vld [vmem:[#allocation4 + $0x50] sm:$0xff]
    %v295 = vld [vmem:[#allocation4 + $0x58] sm:$0xff]
    %v296 = vld [vmem:[#allocation4 + $0x60] sm:$0xff]
    %v297 = vld [vmem:[#allocation4 + $0x68] sm:$0xff]
    %v298 = vld [vmem:[#allocation4 + $0x70] sm:$0xff]
    %v299 = vld [vmem:[#allocation4 + $0x78] sm:$0xff]
    %v300 = vld [vmem:[#allocation4 + $0x80] sm:$0xff]
    %v301 = vld [vmem:[#allocation4 + $0x88] sm:$0xff]
    %v302 = vld [vmem:[#allocation4 + $0x90] sm:$0xff]
    %v303 = vld [vmem:[#allocation4 + $0x98] sm:$0xff]
    %v304 = vld [vmem:[#allocation4 + $0xa0] sm:$0xff]
    %v305 = vld [vmem:[#allocation4 + $0xa8] sm:$0xff]
    %v306 = vld [vmem:[#allocation4 + $0xb0] sm:$0xff]
    %v307 = vld [vmem:[#allocation4 + $0xb8] sm:$0xff]
    %v308 = vld [vmem:[#allocation4 + $0xc0] sm:$0xff]
    %v309 = vld [vmem:[#allocation4 + $0xc8] sm:$0xff]
    %v310 = vld [vmem:[#allocation4 + $0xd0] sm:$0xff]
    %v311 = vld [vmem:[#allocation4 + $0xd8] sm:$0xff]
    %v312 = vld [vmem:[#allocation4 + $0xe0] sm:$0xff]
    %v313 = vld [vmem:[#allocation4 + $0xe8] sm:$0xff]
    %v314 = vld [vmem:[#allocation4 + $0xf0] sm:$0xff]
    %v315 = vld [vmem:[#allocation4 + $0xf8] sm:$0xff]
    %v316 = vld [vmem:[%s5] sm:$0x3]
    %v318 = vlaneseq
    %v319 = vshrl.u32 %v318, 7
    %v320 = vsub.s32 0, %v319
    %v321 = vrot.slane %v316, %v320
    %v322 = vlaneseq
    %v323 = vshrl.u32 %v322, 7
    %v324 = vsub.s32 1, %v323
    %v325 = vrot.slane %v316, %v324
    %v360 = vunpack.c.l.b16 %v284
    %v361 = vunpack.c.h.b16 %v284
    %v362 = vunpack.c.l.b16 %v285
    %v363 = vunpack.c.h.b16 %v285
    %v364 = vunpack.c.l.b16 %v286
    %v365 = vunpack.c.h.b16 %v286
    %v366 = vunpack.c.l.b16 %v287
    %v367 = vunpack.c.h.b16 %v287
    %v368 = vunpack.c.l.b16 %v288
    %v369 = vunpack.c.h.b16 %v288
    %v370 = vunpack.c.l.b16 %v289
    %v371 = vunpack.c.h.b16 %v289
    %v372 = vunpack.c.l.b16 %v290
    %v373 = vunpack.c.h.b16 %v290
    %v374 = vunpack.c.l.b16 %v291
    %v375 = vunpack.c.h.b16 %v291
    %v376 = vunpack.c.l.b16 %v292
    %v377 = vunpack.c.h.b16 %v292
    %v378 = vunpack.c.l.b16 %v293
    %v379 = vunpack.c.h.b16 %v293
    %v380 = vunpack.c.l.b16 %v294
    %v381 = vunpack.c.h.b16 %v294
    %v382 = vunpack.c.l.b16 %v295
    %v383 = vunpack.c.h.b16 %v295
    %v384 = vunpack.c.l.b16 %v296
    %v385 = vunpack.c.h.b16 %v296
    %v386 = vunpack.c.l.b16 %v297
    %v387 = vunpack.c.h.b16 %v297
    %v388 = vunpack.c.l.b16 %v298
    %v389 = vunpack.c.h.b16 %v298
    %v390 = vunpack.c.l.b16 %v299
    %v391 = vunpack.c.h.b16 %v299
    %v392 = vunpack.c.l.b16 %v300
    %v393 = vunpack.c.h.b16 %v300
    %v394 = vunpack.c.l.b16 %v301
    %v395 = vunpack.c.h.b16 %v301
    %v396 = vunpack.c.l.b16 %v302
    %v397 = vunpack.c.h.b16 %v302
    %v398 = vunpack.c.l.b16 %v303
    %v399 = vunpack.c.h.b16 %v303
    %v400 = vunpack.c.l.b16 %v304
    %v401 = vunpack.c.h.b16 %v304
    %v402 = vunpack.c.l.b16 %v305
    %v403 = vunpack.c.h.b16 %v305
    %v404 = vunpack.c.l.b16 %v306
    %v405 = vunpack.c.h.b16 %v306
    %v406 = vunpack.c.l.b16 %v307
    %v407 = vunpack.c.h.b16 %v307
    %v408 = vunpack.c.l.b16 %v308
    %v409 = vunpack.c.h.b16 %v308
    %v410 = vunpack.c.l.b16 %v309
    %v411 = vunpack.c.h.b16 %v309
    %v412 = vunpack.c.l.b16 %v310
    %v413 = vunpack.c.h.b16 %v310
    %v414 = vunpack.c.l.b16 %v311
    %v415 = vunpack.c.h.b16 %v311
    %v416 = vunpack.c.l.b16 %v312
    %v417 = vunpack.c.h.b16 %v312
    %v418 = vunpack.c.l.b16 %v313
    %v419 = vunpack.c.h.b16 %v313
    %v420 = vunpack.c.l.b16 %v314
    %v421 = vunpack.c.h.b16 %v314
    %v422 = vunpack.c.l.b16 %v315
    %v423 = vunpack.c.h.b16 %v315
    %v424 = vpack.c.b16 %v362, %v360
    %v425 = vpack.c.b16 %v363, %v361
    %v426 = vpack.c.b16 %v366, %v364
    %v427 = vpack.c.b16 %v367, %v365
    %v428 = vpack.c.b16 %v370, %v368
    %v429 = vpack.c.b16 %v371, %v369
    %v430 = vpack.c.b16 %v374, %v372
    %v431 = vpack.c.b16 %v375, %v373
    %v432 = vpack.c.b16 %v378, %v376
    %v433 = vpack.c.b16 %v379, %v377
    %v434 = vpack.c.b16 %v382, %v380
    %v435 = vpack.c.b16 %v383, %v381
    %v436 = vpack.c.b16 %v386, %v384
    %v437 = vpack.c.b16 %v387, %v385
    %v438 = vpack.c.b16 %v390, %v388
    %v439 = vpack.c.b16 %v391, %v389
    %v440 = vpack.c.b16 %v394, %v392
    %v441 = vpack.c.b16 %v395, %v393
    %v442 = vpack.c.b16 %v398, %v396
    %v443 = vpack.c.b16 %v399, %v397
    %v444 = vpack.c.b16 %v402, %v400
    %v445 = vpack.c.b16 %v403, %v401
    %v446 = vpack.c.b16 %v406, %v404
    %v447 = vpack.c.b16 %v407, %v405
    %v448 = vpack.c.b16 %v410, %v408
    %v449 = vpack.c.b16 %v411, %v409
    %v450 = vpack.c.b16 %v414, %v412
    %v451 = vpack.c.b16 %v415, %v413
    %v452 = vpack.c.b16 %v418, %v416
    %v453 = vpack.c.b16 %v419, %v417
    %v454 = vpack.c.b16 %v422, %v420
    %v455 = vpack.c.b16 %v423, %v421
    %488 = vmatprep.subr.bf16.mxu0 %v425
    %489 = vmatpush1.bf16.msra.mxu0 %v424
    %490 = vmatprep.subr.bf16.mxu0 %v427
    %491 = vmatpush1.bf16.msra.mxu0 %v426
    %492 = vmatprep.subr.bf16.mxu0 %v429
    %493 = vmatpush1.bf16.msra.mxu0 %v428
    %494 = vmatprep.subr.bf16.mxu0 %v431
    %495 = vmatpush1.bf16.msra.mxu0 %v430
    %496 = vmatprep.subr.bf16.mxu0 %v433
    %497 = vmatpush1.bf16.msra.mxu0 %v432
    %498 = vmatprep.subr.bf16.mxu0 %v435
    %499 = vmatpush1.bf16.msra.mxu0 %v434
    %500 = vmatprep.subr.bf16.mxu0 %v437
    %501 = vmatpush1.bf16.msra.mxu0 %v436
    %502 = vmatprep.subr.bf16.mxu0 %v439
    %503 = vmatpush1.bf16.msra.mxu0 %v438
    %504 = vmatprep.subr.bf16.mxu0 %v441
    %505 = vmatpush1.bf16.msra.mxu0 %v440
    %506 = vmatprep.subr.bf16.mxu0 %v443
    %507 = vmatpush1.bf16.msra.mxu0 %v442
    %508 = vmatprep.subr.bf16.mxu0 %v445
    %509 = vmatpush1.bf16.msra.mxu0 %v444
    %510 = vmatprep.subr.bf16.mxu0 %v447
    %511 = vmatpush1.bf16.msra.mxu0 %v446
    %512 = vmatprep.subr.bf16.mxu0 %v449
    %513 = vmatpush1.bf16.msra.mxu0 %v448
    %514 = vmatprep.subr.bf16.mxu0 %v451
    %515 = vmatpush1.bf16.msra.mxu0 %v450
    %516 = vmatprep.subr.bf16.mxu0 %v453
    %517 = vmatpush1.bf16.msra.mxu0 %v452
    %518 = vmatprep.subr.bf16.mxu0 %v455
    %519 = vmatpush1.bf16.msra.mxu0 %v454
    %520 = vmatprep.mubr.bf16.mxu0 %v283
    %521 = vmatmul.mubr.bf16.gmra.mrb[0].mxu0 %v282
    %v522 = vpop.f32.mrb[0].mxu0
    %v523 = vadd.f32 %v321, %v522
    %v524 = vpop.f32.mrb[0].mxu0
    %v525 = vadd.f32 %v325, %v524
    %v526 = vpop.f32.mrb[0].mxu0
    %v527 = vpop.f32.mrb[0].mxu0
    %528 = vdwg.mxu0
    %v529 = vmax.f32 %v523, 0.0
    %v530 = vmax.f32 %v525, 0.0
    %v531 = vpack.c.bf16 %v529, %v529
    %v532 = vpack.c.bf16 %v530, %v530
    %v533 = vld [vmem:[#allocation6] sm:$0xff]
    %v534 = vld [vmem:[#allocation6 + $0x8] sm:$0xff]
    %v535 = vld [vmem:[#allocation6 + $0x10] sm:$0xff]
    %v536 = vld [vmem:[#allocation6 + $0x18] sm:$0xff]
    %v537 = vld [vmem:[#allocation6 + $0x20] sm:$0xff]
    %v538 = vld [vmem:[#allocation6 + $0x28] sm:$0xff]
    %v539 = vld [vmem:[#allocation6 + $0x30] sm:$0xff]
    %v540 = vld [vmem:[#allocation6 + $0x38] sm:$0xff]
    %v541 = vld [vmem:[#allocation6 + $0x40] sm:$0xff]
    %v542 = vld [vmem:[#allocation6 + $0x48] sm:$0xff]
    %v543 = vld [vmem:[#allocation6 + $0x50] sm:$0xff]
    %v544 = vld [vmem:[#allocation6 + $0x58] sm:$0xff]
    %v545 = vld [vmem:[#allocation6 + $0x60] sm:$0xff]
    %v546 = vld [vmem:[#allocation6 + $0x68] sm:$0xff]
    %v547 = vld [vmem:[#allocation6 + $0x70] sm:$0xff]
    %v548 = vld [vmem:[#allocation6 + $0x78] sm:$0xff]
    %v549 = vld [vmem:[#allocation6 + $0x80] sm:$0xff]
    %v550 = vld [vmem:[#allocation6 + $0x88] sm:$0xff]
    %v551 = vld [vmem:[#allocation6 + $0x90] sm:$0xff]
    %v552 = vld [vmem:[#allocation6 + $0x98] sm:$0xff]
    %v553 = vld [vmem:[#allocation6 + $0xa0] sm:$0xff]
    %v554 = vld [vmem:[#allocation6 + $0xa8] sm:$0xff]
    %v555 = vld [vmem:[#allocation6 + $0xb0] sm:$0xff]
    %v556 = vld [vmem:[#allocation6 + $0xb8] sm:$0xff]
    %v557 = vld [vmem:[#allocation6 + $0xc0] sm:$0xff]
    %v558 = vld [vmem:[#allocation6 + $0xc8] sm:$0xff]
    %v559 = vld [vmem:[#allocation6 + $0xd0] sm:$0xff]
    %v560 = vld [vmem:[#allocation6 + $0xd8] sm:$0xff]
    %v561 = vld [vmem:[#allocation6 + $0xe0] sm:$0xff]
    %v562 = vld [vmem:[#allocation6 + $0xe8] sm:$0xff]
    %v563 = vld [vmem:[#allocation6 + $0xf0] sm:$0xff]
    %v564 = vld [vmem:[#allocation6 + $0xf8] sm:$0xff]
    %v565 = vld [vmem:[%s7] sm:$0x3]
    %v567 = vlaneseq
    %v568 = vshrl.u32 %v567, 7
    %v569 = vsub.s32 0, %v568
    %v570 = vrot.slane %v565, %v569
    %v571 = vlaneseq
    %v572 = vshrl.u32 %v571, 7
    %v573 = vsub.s32 1, %v572
    %v574 = vrot.slane %v565, %v573
    %v609 = vunpack.c.l.b16 %v533
    %v610 = vunpack.c.h.b16 %v533
    %v611 = vunpack.c.l.b16 %v534
    %v612 = vunpack.c.h.b16 %v534
    %v613 = vunpack.c.l.b16 %v535
    %v614 = vunpack.c.h.b16 %v535
    %v615 = vunpack.c.l.b16 %v536
    %v616 = vunpack.c.h.b16 %v536
    %v617 = vunpack.c.l.b16 %v537
    %v618 = vunpack.c.h.b16 %v537
    %v619 = vunpack.c.l.b16 %v538
    %v620 = vunpack.c.h.b16 %v538
    %v621 = vunpack.c.l.b16 %v539
    %v622 = vunpack.c.h.b16 %v539
    %v623 = vunpack.c.l.b16 %v540
    %v624 = vunpack.c.h.b16 %v540
    %v625 = vunpack.c.l.b16 %v541
    %v626 = vunpack.c.h.b16 %v541
    %v627 = vunpack.c.l.b16 %v542
    %v628 = vunpack.c.h.b16 %v542
    %v629 = vunpack.c.l.b16 %v543
    %v630 = vunpack.c.h.b16 %v543
    %v631 = vunpack.c.l.b16 %v544
    %v632 = vunpack.c.h.b16 %v544
    %v633 = vunpack.c.l.b16 %v545
    %v634 = vunpack.c.h.b16 %v545
    %v635 = vunpack.c.l.b16 %v546
    %v636 = vunpack.c.h.b16 %v546
    %v637 = vunpack.c.l.b16 %v547
    %v638 = vunpack.c.h.b16 %v547
    %v639 = vunpack.c.l.b16 %v548
    %v640 = vunpack.c.h.b16 %v548
    %v641 = vunpack.c.l.b16 %v549
    %v642 = vunpack.c.h.b16 %v549
    %v643 = vunpack.c.l.b16 %v550
    %v644 = vunpack.c.h.b16 %v550
    %v645 = vunpack.c.l.b16 %v551
    %v646 = vunpack.c.h.b16 %v551
    %v647 = vunpack.c.l.b16 %v552
    %v648 = vunpack.c.h.b16 %v552
    %v649 = vunpack.c.l.b16 %v553
    %v650 = vunpack.c.h.b16 %v553
    %v651 = vunpack.c.l.b16 %v554
    %v652 = vunpack.c.h.b16 %v554
    %v653 = vunpack.c.l.b16 %v555
    %v654 = vunpack.c.h.b16 %v555
    %v655 = vunpack.c.l.b16 %v556
    %v656 = vunpack.c.h.b16 %v556
    %v657 = vunpack.c.l.b16 %v557
    %v658 = vunpack.c.h.b16 %v557
    %v659 = vunpack.c.l.b16 %v558
    %v660 = vunpack.c.h.b16 %v558
    %v661 = vunpack.c.l.b16 %v559
    %v662 = vunpack.c.h.b16 %v559
    %v663 = vunpack.c.l.b16 %v560
    %v664 = vunpack.c.h.b16 %v560
    %v665 = vunpack.c.l.b16 %v561
    %v666 = vunpack.c.h.b16 %v561
    %v667 = vunpack.c.l.b16 %v562
    %v668 = vunpack.c.h.b16 %v562
    %v669 = vunpack.c.l.b16 %v563
    %v670 = vunpack.c.h.b16 %v563
    %v671 = vunpack.c.l.b16 %v564
    %v672 = vunpack.c.h.b16 %v564
    %v673 = vpack.c.b16 %v611, %v609
    %v674 = vpack.c.b16 %v612, %v610
    %v675 = vpack.c.b16 %v615, %v613
    %v676 = vpack.c.b16 %v616, %v614
    %v677 = vpack.c.b16 %v619, %v617
    %v678 = vpack.c.b16 %v620, %v618
    %v679 = vpack.c.b16 %v623, %v621
    %v680 = vpack.c.b16 %v624, %v622
    %v681 = vpack.c.b16 %v627, %v625
    %v682 = vpack.c.b16 %v628, %v626
    %v683 = vpack.c.b16 %v631, %v629
    %v684 = vpack.c.b16 %v632, %v630
    %v685 = vpack.c.b16 %v635, %v633
    %v686 = vpack.c.b16 %v636, %v634
    %v687 = vpack.c.b16 %v639, %v637
    %v688 = vpack.c.b16 %v640, %v638
    %v689 = vpack.c.b16 %v643, %v641
    %v690 = vpack.c.b16 %v644, %v642
    %v691 = vpack.c.b16 %v647, %v645
    %v692 = vpack.c.b16 %v648, %v646
    %v693 = vpack.c.b16 %v651, %v649
    %v694 = vpack.c.b16 %v652, %v650
    %v695 = vpack.c.b16 %v655, %v653
    %v696 = vpack.c.b16 %v656, %v654
    %v697 = vpack.c.b16 %v659, %v657
    %v698 = vpack.c.b16 %v660, %v658
    %v699 = vpack.c.b16 %v663, %v661
    %v700 = vpack.c.b16 %v664, %v662
    %v701 = vpack.c.b16 %v667, %v665
    %v702 = vpack.c.b16 %v668, %v666
    %v703 = vpack.c.b16 %v671, %v669
    %v704 = vpack.c.b16 %v672, %v670
    %737 = vmatprep.subr.bf16.mxu0 %v674
    %738 = vmatpush1.bf16.msra.mxu0 %v673
    %739 = vmatprep.subr.bf16.mxu0 %v676
    %740 = vmatpush1.bf16.msra.mxu0 %v675
    %741 = vmatprep.subr.bf16.mxu0 %v678
    %742 = vmatpush1.bf16.msra.mxu0 %v677
    %743 = vmatprep.subr.bf16.mxu0 %v680
    %744 = vmatpush1.bf16.msra.mxu0 %v679
    %745 = vmatprep.subr.bf16.mxu0 %v682
    %746 = vmatpush1.bf16.msra.mxu0 %v681
    %747 = vmatprep.subr.bf16.mxu0 %v684
    %748 = vmatpush1.bf16.msra.mxu0 %v683
    %749 = vmatprep.subr.bf16.mxu0 %v686
    %750 = vmatpush1.bf16.msra.mxu0 %v685
    %751 = vmatprep.subr.bf16.mxu0 %v688
    %752 = vmatpush1.bf16.msra.mxu0 %v687
    %753 = vmatprep.subr.bf16.mxu0 %v690
    %754 = vmatpush1.bf16.msra.mxu0 %v689
    %755 = vmatprep.subr.bf16.mxu0 %v692
    %756 = vmatpush1.bf16.msra.mxu0 %v691
    %757 = vmatprep.subr.bf16.mxu0 %v694
    %758 = vmatpush1.bf16.msra.mxu0 %v693
    %759 = vmatprep.subr.bf16.mxu0 %v696
    %760 = vmatpush1.bf16.msra.mxu0 %v695
    %761 = vmatprep.subr.bf16.mxu0 %v698
    %762 = vmatpush1.bf16.msra.mxu0 %v697
    %763 = vmatprep.subr.bf16.mxu0 %v700
    %764 = vmatpush1.bf16.msra.mxu0 %v699
    %765 = vmatprep.subr.bf16.mxu0 %v702
    %766 = vmatpush1.bf16.msra.mxu0 %v701
    %767 = vmatprep.subr.bf16.mxu0 %v704
    %768 = vmatpush1.bf16.msra.mxu0 %v703
    %769 = vmatprep.mubr.bf16.mxu0 %v532
    %770 = vmatmul.mubr.bf16.gmra.mrb[0].mxu0 %v531
    %v771 = vpop.f32.mrb[0].mxu0
    %v772 = vadd.f32 %v570, %v771
    %v773 = vpop.f32.mrb[0].mxu0
    %v774 = vadd.f32 %v574, %v773
    %v775 = vpop.f32.mrb[0].mxu0
    %v776 = vpop.f32.mrb[0].mxu0
    %777 = vdwg.mxu0
    %v778 = vmul.f32 %v774, 0.5
    %v779 = vmul.f32 %v778, 1.442695
    %v780 = vpow.pop %v779
    %v781 = vld [vmem:[%s1] sm:$0xff]
    %v782 = vmul.f32 %v781, %v780
    %v783 = vadd.f32 %v782, %v772
    %v784 = vpack.c.bf16 %v783, %v783
    %v785 = vld [vmem:[#allocation7] sm:$0xff]
    %v786 = vld [vmem:[#allocation7 + $0x8] sm:$0xff]
    %v787 = vld [vmem:[#allocation7 + $0x10] sm:$0xff]
    %v788 = vld [vmem:[#allocation7 + $0x18] sm:$0xff]
    %v789 = vld [vmem:[#allocation7 + $0x20] sm:$0xff]
    %v790 = vld [vmem:[#allocation7 + $0x28] sm:$0xff]
    %v791 = vld [vmem:[#allocation7 + $0x30] sm:$0xff]
    %v792 = vld [vmem:[#allocation7 + $0x38] sm:$0xff]
    %v793 = vld [vmem:[#allocation7 + $0x40] sm:$0xff]
    %v794 = vld [vmem:[#allocation7 + $0x48] sm:$0xff]
    %v795 = vld [vmem:[#allocation7 + $0x50] sm:$0xff]
    %v796 = vld [vmem:[#allocation7 + $0x58] sm:$0xff]
    %v797 = vld [vmem:[#allocation7 + $0x60] sm:$0xff]
    %v798 = vld [vmem:[#allocation7 + $0x68] sm:$0xff]
    %v799 = vld [vmem:[#allocation7 + $0x70] sm:$0xff]
    %v800 = vld [vmem:[#allocation7 + $0x78] sm:$0xff]
    %v801 = vld [vmem:[%s9] sm:$0x3]
    %v803 = vlaneseq
    %v804 = vshrl.u32 %v803, 7
    %v805 = vsub.s32 0, %v804
    %v806 = vrot.slane %v801, %v805
    %v807 = vlaneseq
    %v808 = vshrl.u32 %v807, 7
    %v809 = vsub.s32 1, %v808
    %v810 = vrot.slane %v801, %v809
    %v829 = vunpack.c.l.b16 %v785
    %v830 = vunpack.c.h.b16 %v785
    %v831 = vunpack.c.l.b16 %v786
    %v832 = vunpack.c.h.b16 %v786
    %v833 = vunpack.c.l.b16 %v787
    %v834 = vunpack.c.h.b16 %v787
    %v835 = vunpack.c.l.b16 %v788
    %v836 = vunpack.c.h.b16 %v788
    %v837 = vunpack.c.l.b16 %v789
    %v838 = vunpack.c.h.b16 %v789
    %v839 = vunpack.c.l.b16 %v790
    %v840 = vunpack.c.h.b16 %v790
    %v841 = vunpack.c.l.b16 %v791
    %v842 = vunpack.c.h.b16 %v791
    %v843 = vunpack.c.l.b16 %v792
    %v844 = vunpack.c.h.b16 %v792
    %v845 = vunpack.c.l.b16 %v793
    %v846 = vunpack.c.h.b16 %v793
    %v847 = vunpack.c.l.b16 %v794
    %v848 = vunpack.c.h.b16 %v794
    %v849 = vunpack.c.l.b16 %v795
    %v850 = vunpack.c.h.b16 %v795
    %v851 = vunpack.c.l.b16 %v796
    %v852 = vunpack.c.h.b16 %v796
    %v853 = vunpack.c.l.b16 %v797
    %v854 = vunpack.c.h.b16 %v797
    %v855 = vunpack.c.l.b16 %v798
    %v856 = vunpack.c.h.b16 %v798
    %v857 = vunpack.c.l.b16 %v799
    %v858 = vunpack.c.h.b16 %v799
    %v859 = vunpack.c.l.b16 %v800
    %v860 = vunpack.c.h.b16 %v800
    %v861 = vpack.c.b16 %v831, %v829
    %v862 = vpack.c.b16 %v832, %v830
    %v863 = vpack.c.b16 %v835, %v833
    %v864 = vpack.c.b16 %v836, %v834
    %v865 = vpack.c.b16 %v839, %v837
    %v866 = vpack.c.b16 %v840, %v838
    %v867 = vpack.c.b16 %v843, %v841
    %v868 = vpack.c.b16 %v844, %v842
    %v869 = vpack.c.b16 %v847, %v845
    %v870 = vpack.c.b16 %v848, %v846
    %v871 = vpack.c.b16 %v851, %v849
    %v872 = vpack.c.b16 %v852, %v850
    %v873 = vpack.c.b16 %v855, %v853
    %v874 = vpack.c.b16 %v856, %v854
    %v875 = vpack.c.b16 %v859, %v857
    %v876 = vpack.c.b16 %v860, %v858
    %893 = vmatprep.subr.bf16.mxu0 %v862
    %894 = vmatpush1.bf16.msra.mxu0 %v861
    %895 = vmatprep.subr.bf16.mxu0 %v864
    %896 = vmatpush1.bf16.msra.mxu0 %v863
    %897 = vmatprep.subr.bf16.mxu0 %v866
    %898 = vmatpush1.bf16.msra.mxu0 %v865
    %899 = vmatprep.subr.bf16.mxu0 %v868
    %900 = vmatpush1.bf16.msra.mxu0 %v867
    %901 = vmatprep.subr.bf16.mxu0 %v870
    %902 = vmatpush1.bf16.msra.mxu0 %v869
    %903 = vmatprep.subr.bf16.mxu0 %v872
    %904 = vmatpush1.bf16.msra.mxu0 %v871
    %905 = vmatprep.subr.bf16.mxu0 %v874
    %906 = vmatpush1.bf16.msra.mxu0 %v873
    %907 = vmatprep.subr.bf16.mxu0 %v876
    %908 = vmatpush1.bf16.msra.mxu0 %v875
    %909 = vmatprep.subr.bf16.mxu0 0
    %910 = vmatpush1.bf16.msra.mxu0 0
    %911 = vmatprep.subr.bf16.mxu0 0
    %912 = vmatpush1.bf16.msra.mxu0 0
    %913 = vmatprep.subr.bf16.mxu0 0
    %914 = vmatpush1.bf16.msra.mxu0 0
    %915 = vmatprep.subr.bf16.mxu0 0
    %916 = vmatpush1.bf16.msra.mxu0 0
    %917 = vmatprep.subr.bf16.mxu0 0
    %918 = vmatpush1.bf16.msra.mxu0 0
    %919 = vmatprep.subr.bf16.mxu0 0
    %920 = vmatpush1.bf16.msra.mxu0 0
    %921 = vmatprep.subr.bf16.mxu0 0
    %922 = vmatpush1.bf16.msra.mxu0 0
    %923 = vmatprep.subr.bf16.mxu0 0
    %924 = vmatpush1.bf16.msra.mxu0 0
    %925 = vmatprep.mubr.bf16.mxu0 0
    %926 = vmatmul.mubr.bf16.gmra.mrb[0].mxu0 %v784
    %v927 = vpop.f32.mrb[0].mxu0
    %v928 = vadd.f32 %v806, %v927
    %v929 = vpop.f32.mrb[0].mxu0
    %v930 = vadd.f32 %v810, %v929
    %v931 = vpop.f32.mrb[0].mxu0
    %v932 = vpop.f32.mrb[0].mxu0
    %933 = vdwg.mxu0
    %v934 = vmax.f32 %v928, 0.0
    %v935 = vmax.f32 %v930, 0.0
    %v936 = vpack.c.bf16 %v934, %v934
    %v937 = vpack.c.bf16 %v935, %v935
    %v938 = vld [vmem:[#allocation9] sm:$0xff]
    %v939 = vld [vmem:[#allocation9 + $0x8] sm:$0xff]
    %v940 = vld [vmem:[#allocation9 + $0x10] sm:$0xff]
    %v941 = vld [vmem:[#allocation9 + $0x18] sm:$0xff]
    %v942 = vld [vmem:[#allocation9 + $0x20] sm:$0xff]
    %v943 = vld [vmem:[#allocation9 + $0x28] sm:$0xff]
    %v944 = vld [vmem:[#allocation9 + $0x30] sm:$0xff]
    %v945 = vld [vmem:[#allocation9 + $0x38] sm:$0xff]
    %v946 = vld [vmem:[#allocation9 + $0x40] sm:$0xff]
    %v947 = vld [vmem:[#allocation9 + $0x48] sm:$0xff]
    %v948 = vld [vmem:[#allocation9 + $0x50] sm:$0xff]
    %v949 = vld [vmem:[#allocation9 + $0x58] sm:$0xff]
    %v950 = vld [vmem:[#allocation9 + $0x60] sm:$0xff]
    %v951 = vld [vmem:[#allocation9 + $0x68] sm:$0xff]
    %v952 = vld [vmem:[#allocation9 + $0x70] sm:$0xff]
    %v953 = vld [vmem:[#allocation9 + $0x78] sm:$0xff]
    %v954 = vld [vmem:[#allocation9 + $0x80] sm:$0xff]
    %v955 = vld [vmem:[#allocation9 + $0x88] sm:$0xff]
    %v956 = vld [vmem:[#allocation9 + $0x90] sm:$0xff]
    %v957 = vld [vmem:[#allocation9 + $0x98] sm:$0xff]
    %v958 = vld [vmem:[#allocation9 + $0xa0] sm:$0xff]
    %v959 = vld [vmem:[#allocation9 + $0xa8] sm:$0xff]
    %v960 = vld [vmem:[#allocation9 + $0xb0] sm:$0xff]
    %v961 = vld [vmem:[#allocation9 + $0xb8] sm:$0xff]
    %v962 = vld [vmem:[#allocation9 + $0xc0] sm:$0xff]
    %v963 = vld [vmem:[#allocation9 + $0xc8] sm:$0xff]
    %v964 = vld [vmem:[#allocation9 + $0xd0] sm:$0xff]
    %v965 = vld [vmem:[#allocation9 + $0xd8] sm:$0xff]
    %v966 = vld [vmem:[#allocation9 + $0xe0] sm:$0xff]
    %v967 = vld [vmem:[#allocation9 + $0xe8] sm:$0xff]
    %v968 = vld [vmem:[#allocation9 + $0xf0] sm:$0xff]
    %v969 = vld [vmem:[#allocation9 + $0xf8] sm:$0xff]
    %v970 = vld [vmem:[%s11] sm:$0x3]
    %v972 = vlaneseq
    %v973 = vshrl.u32 %v972, 7
    %v974 = vsub.s32 0, %v973
    %v975 = vrot.slane %v970, %v974
    %v976 = vlaneseq
    %v977 = vshrl.u32 %v976, 7
    %v978 = vsub.s32 1, %v977
    %v979 = vrot.slane %v970, %v978
    %v1014 = vunpack.c.l.b16 %v938
    %v1015 = vunpack.c.h.b16 %v938
    %v1016 = vunpack.c.l.b16 %v939
    %v1017 = vunpack.c.h.b16 %v939
    %v1018 = vunpack.c.l.b16 %v940
    %v1019 = vunpack.c.h.b16 %v940
    %v1020 = vunpack.c.l.b16 %v941
    %v1021 = vunpack.c.h.b16 %v941
    %v1022 = vunpack.c.l.b16 %v942
    %v1023 = vunpack.c.h.b16 %v942
    %v1024 = vunpack.c.l.b16 %v943
    %v1025 = vunpack.c.h.b16 %v943
    %v1026 = vunpack.c.l.b16 %v944
    %v1027 = vunpack.c.h.b16 %v944
    %v1028 = vunpack.c.l.b16 %v945
    %v1029 = vunpack.c.h.b16 %v945
    %v1030 = vunpack.c.l.b16 %v946
    %v1031 = vunpack.c.h.b16 %v946
    %v1032 = vunpack.c.l.b16 %v947
    %v1033 = vunpack.c.h.b16 %v947
    %v1034 = vunpack.c.l.b16 %v948
    %v1035 = vunpack.c.h.b16 %v948
    %v1036 = vunpack.c.l.b16 %v949
    %v1037 = vunpack.c.h.b16 %v949
    %v1038 = vunpack.c.l.b16 %v950
    %v1039 = vunpack.c.h.b16 %v950
    %v1040 = vunpack.c.l.b16 %v951
    %v1041 = vunpack.c.h.b16 %v951
    %v1042 = vunpack.c.l.b16 %v952
    %v1043 = vunpack.c.h.b16 %v952
    %v1044 = vunpack.c.l.b16 %v953
    %v1045 = vunpack.c.h.b16 %v953
    %v1046 = vunpack.c.l.b16 %v954
    %v1047 = vunpack.c.h.b16 %v954
    %v1048 = vunpack.c.l.b16 %v955
    %v1049 = vunpack.c.h.b16 %v955
    %v1050 = vunpack.c.l.b16 %v956
    %v1051 = vunpack.c.h.b16 %v956
    %v1052 = vunpack.c.l.b16 %v957
    %v1053 = vunpack.c.h.b16 %v957
    %v1054 = vunpack.c.l.b16 %v958
    %v1055 = vunpack.c.h.b16 %v958
    %v1056 = vunpack.c.l.b16 %v959
    %v1057 = vunpack.c.h.b16 %v959
    %v1058 = vunpack.c.l.b16 %v960
    %v1059 = vunpack.c.h.b16 %v960
    %v1060 = vunpack.c.l.b16 %v961
    %v1061 = vunpack.c.h.b16 %v961
    %v1062 = vunpack.c.l.b16 %v962
    %v1063 = vunpack.c.h.b16 %v962
    %v1064 = vunpack.c.l.b16 %v963
    %v1065 = vunpack.c.h.b16 %v963
    %v1066 = vunpack.c.l.b16 %v964
    %v1067 = vunpack.c.h.b16 %v964
    %v1068 = vunpack.c.l.b16 %v965
    %v1069 = vunpack.c.h.b16 %v965
    %v1070 = vunpack.c.l.b16 %v966
    %v1071 = vunpack.c.h.b16 %v966
    %v1072 = vunpack.c.l.b16 %v967
    %v1073 = vunpack.c.h.b16 %v967
    %v1074 = vunpack.c.l.b16 %v968
    %v1075 = vunpack.c.h.b16 %v968
    %v1076 = vunpack.c.l.b16 %v969
    %v1077 = vunpack.c.h.b16 %v969
    %v1078 = vpack.c.b16 %v1016, %v1014
    %v1079 = vpack.c.b16 %v1017, %v1015
    %v1080 = vpack.c.b16 %v1020, %v1018
    %v1081 = vpack.c.b16 %v1021, %v1019
    %v1082 = vpack.c.b16 %v1024, %v1022
    %v1083 = vpack.c.b16 %v1025, %v1023
    %v1084 = vpack.c.b16 %v1028, %v1026
    %v1085 = vpack.c.b16 %v1029, %v1027
    %v1086 = vpack.c.b16 %v1032, %v1030
    %v1087 = vpack.c.b16 %v1033, %v1031
    %v1088 = vpack.c.b16 %v1036, %v1034
    %v1089 = vpack.c.b16 %v1037, %v1035
    %v1090 = vpack.c.b16 %v1040, %v1038
    %v1091 = vpack.c.b16 %v1041, %v1039
    %v1092 = vpack.c.b16 %v1044, %v1042
    %v1093 = vpack.c.b16 %v1045, %v1043
    %v1094 = vpack.c.b16 %v1048, %v1046
    %v1095 = vpack.c.b16 %v1049, %v1047
    %v1096 = vpack.c.b16 %v1052, %v1050
    %v1097 = vpack.c.b16 %v1053, %v1051
    %v1098 = vpack.c.b16 %v1056, %v1054
    %v1099 = vpack.c.b16 %v1057, %v1055
    %v1100 = vpack.c.b16 %v1060, %v1058
    %v1101 = vpack.c.b16 %v1061, %v1059
    %v1102 = vpack.c.b16 %v1064, %v1062
    %v1103 = vpack.c.b16 %v1065, %v1063
    %v1104 = vpack.c.b16 %v1068, %v1066
    %v1105 = vpack.c.b16 %v1069, %v1067
    %v1106 = vpack.c.b16 %v1072, %v1070
    %v1107 = vpack.c.b16 %v1073, %v1071
    %v1108 = vpack.c.b16 %v1076, %v1074
    %v1109 = vpack.c.b16 %v1077, %v1075
    %1142 = vmatprep.subr.bf16.mxu0 %v1079
    %1143 = vmatpush1.bf16.msra.mxu0 %v1078
    %1144 = vmatprep.subr.bf16.mxu0 %v1081
    %1145 = vmatpush1.bf16.msra.mxu0 %v1080
    %1146 = vmatprep.subr.bf16.mxu0 %v1083
    %1147 = vmatpush1.bf16.msra.mxu0 %v1082
    %1148 = vmatprep.subr.bf16.mxu0 %v1085
    %1149 = vmatpush1.bf16.msra.mxu0 %v1084
    %1150 = vmatprep.subr.bf16.mxu0 %v1087
    %1151 = vmatpush1.bf16.msra.mxu0 %v1086
    %1152 = vmatprep.subr.bf16.mxu0 %v1089
    %1153 = vmatpush1.bf16.msra.mxu0 %v1088
    %1154 = vmatprep.subr.bf16.mxu0 %v1091
    %1155 = vmatpush1.bf16.msra.mxu0 %v1090
    %1156 = vmatprep.subr.bf16.mxu0 %v1093
    %1157 = vmatpush1.bf16.msra.mxu0 %v1092
    %1158 = vmatprep.subr.bf16.mxu0 %v1095
    %1159 = vmatpush1.bf16.msra.mxu0 %v1094
    %1160 = vmatprep.subr.bf16.mxu0 %v1097
    %1161 = vmatpush1.bf16.msra.mxu0 %v1096
    %1162 = vmatprep.subr.bf16.mxu0 %v1099
    %1163 = vmatpush1.bf16.msra.mxu0 %v1098
    %1164 = vmatprep.subr.bf16.mxu0 %v1101
    %1165 = vmatpush1.bf16.msra.mxu0 %v1100
    %1166 = vmatprep.subr.bf16.mxu0 %v1103
    %1167 = vmatpush1.bf16.msra.mxu0 %v1102
    %1168 = vmatprep.subr.bf16.mxu0 %v1105
    %1169 = vmatpush1.bf16.msra.mxu0 %v1104
    %1170 = vmatprep.subr.bf16.mxu0 %v1107
    %1171 = vmatpush1.bf16.msra.mxu0 %v1106
    %1172 = vmatprep.subr.bf16.mxu0 %v1109
    %1173 = vmatpush1.bf16.msra.mxu0 %v1108
    %1174 = vmatprep.mubr.bf16.mxu0 %v937
    %1175 = vmatmul.mubr.bf16.gmra.mrb[0].mxu0 %v936
    %v1176 = vpop.f32.mrb[0].mxu0
    %v1177 = vadd.f32 %v975, %v1176
    %v1178 = vpop.f32.mrb[0].mxu0
    %v1179 = vadd.f32 %v979, %v1178
    %v1180 = vpop.f32.mrb[0].mxu0
    %v1181 = vpop.f32.mrb[0].mxu0
    %1182 = vdwg.mxu0
    %v1183 = vmax.f32 %v1177, 0.0
    %v1184 = vmax.f32 %v1179, 0.0
    %v1185 = vpack.c.bf16 %v1183, %v1183
    %v1186 = vpack.c.bf16 %v1184, %v1184
    %v1187 = vld [vmem:[#allocation10] sm:$0xf]
    %v1188 = vld [vmem:[#allocation10 + $0x4] sm:$0xf]
    %v1189 = vld [vmem:[#allocation10 + $0x8] sm:$0xf]
    %v1190 = vld [vmem:[#allocation10 + $0xc] sm:$0xf]
    %v1191 = vld [vmem:[#allocation10 + $0x10] sm:$0xf]
    %v1192 = vld [vmem:[#allocation10 + $0x14] sm:$0xf]
    %v1193 = vld [vmem:[#allocation10 + $0x18] sm:$0xf]
    %v1194 = vld [vmem:[#allocation10 + $0x1c] sm:$0xf]
    %v1195 = vld [vmem:[#allocation10 + $0x20] sm:$0xf]
    %v1196 = vld [vmem:[#allocation10 + $0x24] sm:$0xf]
    %v1197 = vld [vmem:[#allocation10 + $0x28] sm:$0xf]
    %v1198 = vld [vmem:[#allocation10 + $0x2c] sm:$0xf]
    %v1199 = vld [vmem:[#allocation10 + $0x30] sm:$0xf]
    %v1200 = vld [vmem:[#allocation10 + $0x34] sm:$0xf]
    %v1201 = vld [vmem:[#allocation10 + $0x38] sm:$0xf]
    %v1202 = vld [vmem:[#allocation10 + $0x3c] sm:$0xf]
    %v1203 = vld [vmem:[#allocation10 + $0x40] sm:$0xf]
    %v1204 = vld [vmem:[#allocation10 + $0x44] sm:$0xf]
    %v1205 = vld [vmem:[#allocation10 + $0x48] sm:$0xf]
    %v1206 = vld [vmem:[#allocation10 + $0x4c] sm:$0xf]
    %v1207 = vld [vmem:[#allocation10 + $0x50] sm:$0xf]
    %v1208 = vld [vmem:[#allocation10 + $0x54] sm:$0xf]
    %v1209 = vld [vmem:[#allocation10 + $0x58] sm:$0xf]
    %v1210 = vld [vmem:[#allocation10 + $0x5c] sm:$0xf]
    %v1211 = vld [vmem:[#allocation10 + $0x60] sm:$0xf]
    %v1212 = vld [vmem:[#allocation10 + $0x64] sm:$0xf]
    %v1213 = vld [vmem:[#allocation10 + $0x68] sm:$0xf]
    %v1214 = vld [vmem:[#allocation10 + $0x6c] sm:$0xf]
    %v1215 = vld [vmem:[#allocation10 + $0x70] sm:$0xf]
    %v1216 = vld [vmem:[#allocation10 + $0x74] sm:$0xf]
    %v1217 = vld [vmem:[#allocation10 + $0x78] sm:$0xf]
    %v1218 = vld [vmem:[#allocation10 + $0x7c] sm:$0xf]
    %v1219 = vld [vmem:[%s13] sm:$0x1]
    %v1221 = vlaneseq
    %v1222 = vshrl.u32 %v1221, 7
    %v1223 = vsub.s32 0, %v1222
    %v1224 = vrot.slane %v1219, %v1223
    %v1258 = vunpack.c.l.b16 %v1187
    %v1259 = vunpack.c.l.b16 %v1188
    %v1260 = vunpack.c.l.b16 %v1189
    %v1261 = vunpack.c.l.b16 %v1190
    %v1262 = vunpack.c.l.b16 %v1191
    %v1263 = vunpack.c.l.b16 %v1192
    %v1264 = vunpack.c.l.b16 %v1193
    %v1265 = vunpack.c.l.b16 %v1194
    %v1266 = vunpack.c.l.b16 %v1195
    %v1267 = vunpack.c.l.b16 %v1196
    %v1268 = vunpack.c.l.b16 %v1197
    %v1269 = vunpack.c.l.b16 %v1198
    %v1270 = vunpack.c.l.b16 %v1199
    %v1271 = vunpack.c.l.b16 %v1200
    %v1272 = vunpack.c.l.b16 %v1201
    %v1273 = vunpack.c.l.b16 %v1202
    %v1274 = vunpack.c.l.b16 %v1203
    %v1275 = vunpack.c.l.b16 %v1204
    %v1276 = vunpack.c.l.b16 %v1205
    %v1277 = vunpack.c.l.b16 %v1206
    %v1278 = vunpack.c.l.b16 %v1207
    %v1279 = vunpack.c.l.b16 %v1208
    %v1280 = vunpack.c.l.b16 %v1209
    %v1281 = vunpack.c.l.b16 %v1210
    %v1282 = vunpack.c.l.b16 %v1211
    %v1283 = vunpack.c.l.b16 %v1212
    %v1284 = vunpack.c.l.b16 %v1213
    %v1285 = vunpack.c.l.b16 %v1214
    %v1286 = vunpack.c.l.b16 %v1215
    %v1287 = vunpack.c.l.b16 %v1216
    %v1288 = vunpack.c.l.b16 %v1217
    %v1289 = vunpack.c.l.b16 %v1218
    %v1290 = vpack.c.b16 %v1259, %v1258
    %v1291 = vpack.c.b16 %v1261, %v1260
    %v1292 = vpack.c.b16 %v1263, %v1262
    %v1293 = vpack.c.b16 %v1265, %v1264
    %v1294 = vpack.c.b16 %v1267, %v1266
    %v1295 = vpack.c.b16 %v1269, %v1268
    %v1296 = vpack.c.b16 %v1271, %v1270
    %v1297 = vpack.c.b16 %v1273, %v1272
    %v1298 = vpack.c.b16 %v1275, %v1274
    %v1299 = vpack.c.b16 %v1277, %v1276
    %v1300 = vpack.c.b16 %v1279, %v1278
    %v1301 = vpack.c.b16 %v1281, %v1280
    %v1302 = vpack.c.b16 %v1283, %v1282
    %v1303 = vpack.c.b16 %v1285, %v1284
    %v1304 = vpack.c.b16 %v1287, %v1286
    %v1305 = vpack.c.b16 %v1289, %v1288
    %1322 = vmatprep.subr.bf16.mxu0 0
    %1323 = vmatpush1.bf16.msra.mxu0 %v1290
    %1324 = vmatprep.subr.bf16.mxu0 0
    %1325 = vmatpush1.bf16.msra.mxu0 %v1291
    %1326 = vmatprep.subr.bf16.mxu0 0
    %1327 = vmatpush1.bf16.msra.mxu0 %v1292
    %1328 = vmatprep.subr.bf16.mxu0 0
    %1329 = vmatpush1.bf16.msra.mxu0 %v1293
    %1330 = vmatprep.subr.bf16.mxu0 0
    %1331 = vmatpush1.bf16.msra.mxu0 %v1294
    %1332 = vmatprep.subr.bf16.mxu0 0
    %1333 = vmatpush1.bf16.msra.mxu0 %v1295
    %1334 = vmatprep.subr.bf16.mxu0 0
    %1335 = vmatpush1.bf16.msra.mxu0 %v1296
    %1336 = vmatprep.subr.bf16.mxu0 0
    %1337 = vmatpush1.bf16.msra.mxu0 %v1297
    %1338 = vmatprep.subr.bf16.mxu0 0
    %1339 = vmatpush1.bf16.msra.mxu0 %v1298
    %1340 = vmatprep.subr.bf16.mxu0 0
    %1341 = vmatpush1.bf16.msra.mxu0 %v1299
    %1342 = vmatprep.subr.bf16.mxu0 0
    %1343 = vmatpush1.bf16.msra.mxu0 %v1300
    %1344 = vmatprep.subr.bf16.mxu0 0
    %1345 = vmatpush1.bf16.msra.mxu0 %v1301
    %1346 = vmatprep.subr.bf16.mxu0 0
    %1347 = vmatpush1.bf16.msra.mxu0 %v1302
    %1348 = vmatprep.subr.bf16.mxu0 0
    %1349 = vmatpush1.bf16.msra.mxu0 %v1303
    %1350 = vmatprep.subr.bf16.mxu0 0
    %1351 = vmatpush1.bf16.msra.mxu0 %v1304
    %1352 = vmatprep.subr.bf16.mxu0 0
    %1353 = vmatpush1.bf16.msra.mxu0 %v1305
    %1354 = vmatprep.mubr.bf16.mxu0 %v1186
    %1355 = vmatmul.mubr.bf16.gmra.mrb[0].mxu0 %v1185
    %v1356 = vpop.f32.mrb[0].mxu0
    %v1357 = vadd.f32 %v1224, %v1356
    %v1358 = vpop.f32.mrb[0].mxu0
    %v1359 = vpop.f32.mrb[0].mxu0
    %v1360 = vpop.f32.mrb[0].mxu0
    %1361 = vdwg.mxu0
    %1362 = vst [vmem:[%s14] sm:$0xff] %v1357
    %1363 = vst [vmem:[%s14 + $0x8] sm:$0xff] %v772
    %1364 = vst [vmem:[%s14 + $0x10] sm:$0xff] %v774
    // Predicated region
    $region82: #{vae_forward.1} parent=1 // pred_check
      _
    $region83: #{vae_forward.1} parent=1 // pred_check_branch
      %1366 = sbr.rel (0) target = $region85
    $region84: #{vae_forward.1} parent=1 // pred_region
      _
    $region85: #{vae_forward.1} parent=1 // pred_fallthru
      _
    // Predicated region
    $region86: #{vae_forward.1} parent=1 // pred_check
      _
    $region87: #{vae_forward.1} parent=1 // pred_check_branch
      %1368 = sbr.rel (0) target = $region89
    $region88: #{vae_forward.1} parent=1 // pred_region
      _
    $region89: #{vae_forward.1} parent=1 // pred_fallthru
      _
    %1369 = vsyncpa [#allocation3], 1
    %1370 = vsyncpa [#allocation5], 1
    %1371 = vsyncpa [#allocation8], 1
    %1372 = vsyncpa [#allocation11], 1

</llo_original>
